<compile_context>
chip_gen: v6e
topology: v6e:2x2x1
jax: 0.10.0
libtpu: 0.0.40
codegen_flags: <defaults>
</compile_context>

<pallas_src>
import functools

import jax
import jax.numpy as jnp
from jax.experimental import pallas as pl
from jax.experimental.pallas import tpu as pltpu


def _round_up(n, m):
    return ((n + m - 1) // m) * m


def _pad2(a, rows, cols):
    r, c = a.shape
    if r == rows and c == cols:
        return a
    return jnp.pad(a, ((0, rows - r), (0, cols - c)))


# ----------------------------- kernel -----------------------------
def ffn_kernel(x_ref, w1_ref, b1_ref, w2_ref, b2_ref, o_ref, acc_ref, *, compute_dtype):
    """One (row-tile, hidden-slab) grid step of GELU(x @ W1 + b1) @ W2 + b2."""
    k = pl.program_id(1)

    # Seed the f32 accumulator with b2 (removes the epilogue add on the last k step).
    @pl.when(k == 0)
    def _():
        acc_ref[...] = jnp.broadcast_to(b2_ref[...].astype(jnp.float32), acc_ref.shape)

    # First matmul: (tm, C) @ (C, th) -> f32 (tm, th). Weights are already in
    # compute_dtype (pre-cast at setup); only the activation tile is cast here.
    x = x_ref[...].astype(compute_dtype)
    h = jnp.dot(x, w1_ref[...], preferred_element_type=jnp.float32)
    h = h + b1_ref[...].astype(jnp.float32)            # (1, th) broadcasts over rows

    # Exact (erf) GELU in f32, matching torch.nn.GELU(approximate='none').
    h = 0.5 * h * (1.0 + jax.lax.erf(h * 0.7071067811865476))

    # Second matmul: accumulate this hidden slab's contribution into the f32 accumulator.
    acc_ref[...] += jnp.dot(h.astype(compute_dtype), w2_ref[...],
                            preferred_element_type=jnp.float32)

    @pl.when(k == pl.num_programs(1) - 1)
    def _():
        o_ref[...] = acc_ref[...].astype(o_ref.dtype)


# -------------------------- parameter prep --------------------------
def prepare_ffn_params(params, compute_dtype=jnp.bfloat16):
    """Pad weights to lane-dense shapes (multiples of 128) and cast them to the compute
    dtype ONCE, outside the per-forward path. Weights stored (in, out) = torch weight.T."""
    C, H = params["w1"].shape
    C_pad = _round_up(C, 128)
    H_pad = _round_up(H, 128)
    return {
        "w1": _pad2(params["w1"], C_pad, H_pad).astype(compute_dtype),
        "b1": _pad2(params["b1"].reshape(1, -1), 1, H_pad).astype(jnp.float32),
        "w2": _pad2(params["w2"], H_pad, C_pad).astype(compute_dtype),
        "b2": _pad2(params["b2"].reshape(1, -1), 1, C_pad).astype(jnp.float32),
        "dim": C,
        "hidden": H,
        "compute_dtype": compute_dtype,
    }


# -------------------------- tile selection --------------------------
def _vmem_bytes(tm, th, C_pad, x_bytes, w_bytes, out_bytes):
    return (tm * C_pad * 4                 # f32 accumulator scratch
            + 2 * tm * C_pad * x_bytes     # x row tile (double-buffered)
            + 2 * tm * C_pad * out_bytes   # output tile
            + 2 * C_pad * th * w_bytes     # w1 slab (double-buffered)
            + 2 * th * C_pad * w_bytes     # w2 slab (double-buffered)
            + 2 * (th + C_pad) * 4         # biases
            + tm * th * 4)                 # f32 GELU intermediate


def _pick_tiles(N, C_pad, H_pad, x_bytes, w_bytes, out_bytes, tm, th):
    try:
        vmem_cap = int(pltpu.get_tpu_info().vmem_capacity_bytes)
    except Exception:
        vmem_cap = 64 * 1024 * 1024        # conservative default (v7x per-TC VMEM)
    big_vmem = vmem_cap >= 100 * 1024 * 1024   # v5e / v6e (128 MiB) vs v7x (64 MiB)

    if tm is None:
        # At/above the weight-restream roofline threshold (~680 rows v6e, ~620 v7x, ~240 v5e)
        tm = 768 if big_vmem else 512
    if th is None:
        th = 512 if big_vmem else 256

    # th: a multiple of 128 that divides H_pad exactly (no wasted zero hidden slab).
    th = max(128, min(_round_up(th, 128), H_pad))
    m = H_pad // 128
    d = max(dd for dd in range(1, th // 128 + 1) if m % dd == 0)
    th = d * 128

    # Row tile: multiple of 8, no larger than the (padded) row count.
    tm = min(_round_up(tm, 8), _round_up(N, 8))

    # Keep >= 2 row tiles when rows are plentiful so both v7x TensorCores get work.
    if _round_up(N, tm) // tm < 2 and tm >= 256:
        tm = _round_up(-(-tm // 2), 8)

    # Shrink tm until the working set fits comfortably inside VMEM.
    cap = int(0.80 * vmem_cap)
    while _vmem_bytes(tm, th, C_pad, x_bytes, w_bytes, out_bytes) > cap and tm > 8:
        tm = max(8, _round_up(tm // 2, 8))

    budget = _vmem_bytes(tm, th, C_pad, x_bytes, w_bytes, out_bytes)
    vmem_limit = int(min(cap, max(32 * 1024 * 1024, int(1.5 * budget))))
    return tm, th, vmem_limit


# ----------------------------- forward -----------------------------
def feed_forward(x, prep, *, tm=None, th=None):
    """Pallas FeedForward forward. x: (..., dim). `prep` comes from prepare_ffn_params."""
    orig_shape = x.shape
    C = prep["dim"]
    compute_dtype = prep["compute_dtype"]
    w1p, b1p, w2p, b2p = prep["w1"], prep["b1"], prep["w2"], prep["b2"]
    C_pad, H_pad = w1p.shape

    x2 = x.reshape(-1, C)
    N = x2.shape[0]

    x_bytes = jnp.dtype(x.dtype).itemsize
    w_bytes = jnp.dtype(w1p.dtype).itemsize
    out_bytes = jnp.dtype(x.dtype).itemsize

    tm, th, vmem_limit = _pick_tiles(N, C_pad, H_pad, x_bytes, w_bytes, out_bytes, tm, th)

    N_pad = _round_up(N, tm)
    xp = _pad2(x2, N_pad, C_pad)

    grid = (N_pad // tm, H_pad // th)

    # Real traffic: weights are re-streamed once per row tile; x / out streamed once.
    n_row_tiles = grid[0]
    weight_bytes = (w1p.size + w2p.size) * w_bytes + (b1p.size + b2p.size) * 4
    cost = pl.CostEstimate(
        flops=4 * N_pad * C_pad * H_pad,                     # two matmuls
        transcendentals=N_pad * H_pad,                       # erf
        bytes_accessed=n_row_tiles * weight_bytes
        + N_pad * C_pad * (x_bytes + out_bytes),
    )

    out = pl.pallas_call(
        functools.partial(ffn_kernel, compute_dtype=compute_dtype),
        out_shape=jax.ShapeDtypeStruct((N_pad, C_pad), x.dtype),
        grid_spec=pltpu.PrefetchScalarGridSpec(
            num_scalar_prefetch=0,
            grid=grid,
            in_specs=[
                pl.BlockSpec((tm, C_pad), lambda i, k: (i, 0)),   # x row tile (reused over k)
                pl.BlockSpec((C_pad, th), lambda i, k: (0, k)),   # w1 column slab (compute dtype)
                pl.BlockSpec((1, th),     lambda i, k: (0, k)),   # b1 slab
                pl.BlockSpec((th, C_pad), lambda i, k: (k, 0)),   # w2 row slab (compute dtype)
                pl.BlockSpec((1, C_pad),  lambda i, k: (0, 0)),   # b2
            ],
            out_specs=pl.BlockSpec((tm, C_pad), lambda i, k: (i, 0)),
            scratch_shapes=[pltpu.VMEM((tm, C_pad), jnp.float32)],
        ),
        compiler_params=pltpu.CompilerParams(
            dimension_semantics=("parallel", "arbitrary"),
            vmem_limit_bytes=vmem_limit,
        ),
        cost_estimate=cost,
    )(xp, w1p, b1p, w2p, b2p)

    return out[:N, :C].reshape(orig_shape)


# ---- pure-JAX reference (mirrors the PyTorch forward) ----
def reference_ffn(x, params):
    h = x @ params["w1"] + params["b1"]
    h = jax.nn.gelu(h, approximate=False)
    return h @ params["w2"] + params["b2"]


def _make_params(key, dim, hidden):
    k1, k2, k3, k4 = jax.random.split(key, 4)
    return {
        "w1": 0.05 * jax.random.normal(k1, (dim, hidden), jnp.float32),
        "b1": 0.01 * jax.random.normal(k2, (hidden,), jnp.float32),
        "w2": 0.05 * jax.random.normal(k3, (hidden, dim), jnp.float32),
        "b2": 0.01 * jax.random.normal(k4, (dim,), jnp.float32),
    }


if __name__ == "__main__":
    root = jax.random.PRNGKey(0)
    kp1, kx1, kp2, kx2 = jax.random.split(root, 4)

    # Small shape consistent with the module: x = (batch=2, seq=8, dim=32), hidden = 4*dim.
    B, T, dim = 2, 8, 32
    params = _make_params(kp1, dim, 4 * dim)
    x = jax.random.normal(kx1, (B, T, dim), jnp.float32)
    ref = reference_ffn(x, params)

    # f32 compute path (tight tolerance vs reference).
    prep_f32 = prepare_ffn_params(params, compute_dtype=jnp.float32)
    out = jax.block_until_ready(feed_forward(x, prep_f32))
    assert out.shape == x.shape
    assert jnp.allclose(out, ref, atol=1e-4, rtol=1e-4), "f32 path mismatch vs reference"

    # Default bf16 MXU path (weights pre-cast, f32 accumulation), looser tolerance.
    prep_bf16 = prepare_ffn_params(params)          # compute_dtype defaults to bf16
    out_bf = jax.block_until_ready(feed_forward(x, prep_bf16))
    assert jnp.allclose(out_bf, ref, atol=3e-2, rtol=3e-2), "bf16 path mismatch vs reference"

    # Second shape: multi row-tile grid, hidden-slab streaming, C/H padding (dim=96).
    B2, T2, dim2 = 2, 80, 96
    params2 = _make_params(kp2, dim2, 4 * dim2)
    x2 = jax.random.normal(kx2, (B2, T2, dim2), jnp.float32)
    ref2 = reference_ffn(x2, params2)

    prep2_f32 = prepare_ffn_params(params2, compute_dtype=jnp.float32)
    out2 = jax.block_until_ready(feed_forward(x2, prep2_f32, tm=128, th=128))
    assert out2.shape == x2.shape
    assert jnp.allclose(out2, ref2, atol=1e-4, rtol=1e-4), "tiled f32 path mismatch vs reference"

    prep2_bf16 = prepare_ffn_params(params2)
    out2_bf = jax.block_until_ready(feed_forward(x2, prep2_bf16))   # auto-picked tiles
    assert jnp.allclose(out2_bf, ref2, atol=3e-2, rtol=3e-2), "tiled bf16 path mismatch vs reference"

    print("KERNEL_OK")
</pallas_src>

<mosaic_0001>
module attributes {stable_mosaic.version = 11 : i64} {
  func.func @ffn_kernel(%arg0: i32, %arg1: i32, %arg2: memref<16x128xf32, #tpu.memory_space<vmem>>, %arg3: memref<128x128xf32, #tpu.memory_space<vmem>>, %arg4: memref<1x128xf32, #tpu.memory_space<vmem>>, %arg5: memref<128x128xf32, #tpu.memory_space<vmem>>, %arg6: memref<1x128xf32, #tpu.memory_space<vmem>>, %arg7: memref<16x128xf32, #tpu.memory_space<vmem>>, %arg8: memref<16x128xf32, #tpu.memory_space<vmem>>) attributes {dimension_semantics = [#tpu.dimension_semantics<parallel>, #tpu.dimension_semantics<arbitrary>], iteration_bounds = array<i64: 1, 1>, scalar_prefetch = 0 : i64, scratch_operands = 1 : i64, tpu.core_type = #tpu.core_type<tc>, window_params = [{transform_indices = @transform_0, window_bounds = array<i64: 16, 128>}, {transform_indices = @transform_1, window_bounds = array<i64: 128, 128>}, {transform_indices = @transform_2, window_bounds = array<i64: 1, 128>}, {transform_indices = @transform_3, window_bounds = array<i64: 128, 128>}, {pipeline_mode = #tpu.pipeline_mode<synchronous>, transform_indices = @transform_4, window_bounds = array<i64: 1, 128>}, {transform_indices = @transform_5, window_bounds = array<i64: 16, 128>}]} {
    %c0_i32 = arith.constant 0 : i32
    %0 = arith.cmpi eq, %arg1, %c0_i32 : i32
    %1 = arith.extui %0 : i1 to i32
    %c0_i32_0 = arith.constant 0 : i32
    %2 = arith.cmpi ne, %1, %c0_i32_0 : i32
    scf.if %2 {
      %c0_18 = arith.constant 0 : index
      %c0_19 = arith.constant 0 : index
      %25 = vector.load %arg6[%c0_18, %c0_19] : memref<1x128xf32, #tpu.memory_space<vmem>>, vector<1x128xf32>
      %26 = vector.shape_cast %25 : vector<1x128xf32> to vector<1x128xf32>
      %27 = vector.broadcast %26 : vector<1x128xf32> to vector<16x128xf32>
      %c0_20 = arith.constant 0 : index
      %c0_21 = arith.constant 0 : index
      %28 = vector.load %arg8[%c0_20, %c0_21] : memref<16x128xf32, #tpu.memory_space<vmem>>, vector<16x128xf32>
      tpu.vector_store %arg8[%c0_20, %c0_21], %27 {strides = array<i32>} : memref<16x128xf32, #tpu.memory_space<vmem>>, vector<16x128xf32>,
    } else {
    }
    %c0 = arith.constant 0 : index
    %c0_1 = arith.constant 0 : index
    %3 = vector.load %arg2[%c0, %c0_1] : memref<16x128xf32, #tpu.memory_space<vmem>>, vector<16x128xf32>
    %c0_2 = arith.constant 0 : index
    %c0_3 = arith.constant 0 : index
    %4 = vector.load %arg3[%c0_2, %c0_3] : memref<128x128xf32, #tpu.memory_space<vmem>>, vector<128x128xf32>
    %cst = arith.constant dense<0.000000e+00> : vector<16x128xf32>
    %5 = tpu.matmul %3, %4, %cst {dimension_numbers = #tpu.dot_dimension_numbers<[1], [0], [0], [1], [0, 0, 1, 1], [], []>} : vector<16x128xf32>, vector<128x128xf32>, vector<16x128xf32> -> vector<16x128xf32>
    %c0_4 = arith.constant 0 : index
    %c0_5 = arith.constant 0 : index
    %6 = vector.load %arg4[%c0_4, %c0_5] : memref<1x128xf32, #tpu.memory_space<vmem>>, vector<1x128xf32>
    %7 = vector.broadcast %6 : vector<1x128xf32> to vector<16x128xf32>
    %8 = arith.addf %5, %7 : vector<16x128xf32>
    %cst_6 = arith.constant 5.000000e-01 : f32
    %9 = vector.broadcast %cst_6 : f32 to vector<16x128xf32>
    %10 = arith.mulf %9, %8 : vector<16x128xf32>
    %cst_7 = arith.constant 0.707106769 : f32
    %11 = vector.broadcast %cst_7 : f32 to vector<16x128xf32>
    %12 = arith.mulf %8, %11 : vector<16x128xf32>
    %13 = math.erf %12 : vector<16x128xf32>
    %cst_8 = arith.constant 1.000000e+00 : f32
    %14 = vector.broadcast %cst_8 : f32 to vector<16x128xf32>
    %15 = arith.addf %14, %13 : vector<16x128xf32>
    %16 = arith.mulf %10, %15 : vector<16x128xf32>
    %c0_9 = arith.constant 0 : index
    %c0_10 = arith.constant 0 : index
    %17 = vector.load %arg8[%c0_9, %c0_10] : memref<16x128xf32, #tpu.memory_space<vmem>>, vector<16x128xf32>
    %c0_11 = arith.constant 0 : index
    %c0_12 = arith.constant 0 : index
    %18 = vector.load %arg5[%c0_11, %c0_12] : memref<128x128xf32, #tpu.memory_space<vmem>>, vector<128x128xf32>
    %cst_13 = arith.constant dense<0.000000e+00> : vector<16x128xf32>
    %19 = tpu.matmul %16, %18, %cst_13 {dimension_numbers = #tpu.dot_dimension_numbers<[1], [0], [0], [1], [0, 0, 1, 1], [], []>} : vector<16x128xf32>, vector<128x128xf32>, vector<16x128xf32> -> vector<16x128xf32>
    %20 = arith.addf %17, %19 : vector<16x128xf32>
    %c0_14 = arith.constant 0 : index
    %c0_15 = arith.constant 0 : index
    %21 = vector.load %arg8[%c0_14, %c0_15] : memref<16x128xf32, #tpu.memory_space<vmem>>, vector<16x128xf32>
    tpu.vector_store %arg8[%c0_14, %c0_15], %20 {strides = array<i32>} : memref<16x128xf32, #tpu.memory_space<vmem>>, vector<16x128xf32>,
    %c0_i32_16 = arith.constant 0 : i32
    %22 = arith.cmpi eq, %arg1, %c0_i32_16 : i32
    %23 = arith.extui %22 : i1 to i32
    %c0_i32_17 = arith.constant 0 : i32
    %24 = arith.cmpi ne, %23, %c0_i32_17 : i32
    scf.if %24 {
      %c0_18 = arith.constant 0 : index
      %c0_19 = arith.constant 0 : index
      %25 = vector.load %arg8[%c0_18, %c0_19] : memref<16x128xf32, #tpu.memory_space<vmem>>, vector<16x128xf32>
      %c0_20 = arith.constant 0 : index
      %c0_21 = arith.constant 0 : index
      %26 = vector.load %arg7[%c0_20, %c0_21] : memref<16x128xf32, #tpu.memory_space<vmem>>, vector<16x128xf32>
      tpu.vector_store %arg7[%c0_20, %c0_21], %25 {strides = array<i32>} : memref<16x128xf32, #tpu.memory_space<vmem>>, vector<16x128xf32>,
    } else {
    }
    return
  }
  func.func @transform_0(%arg0: i32, %arg1: i32) -> (i32, i32) {
    %c0_i32 = arith.constant 0 : i32
    %c0_i32_0 = arith.constant 0 : i32
    return %arg0, %c0_i32 : i32, i32
  }
  func.func @transform_1(%arg0: i32, %arg1: i32) -> (i32, i32) {
    %c0_i32 = arith.constant 0 : i32
    %c0_i32_0 = arith.constant 0 : i32
    return %c0_i32, %arg1 : i32, i32
  }
  func.func @transform_2(%arg0: i32, %arg1: i32) -> (i32, i32) {
    %c0_i32 = arith.constant 0 : i32
    %c0_i32_0 = arith.constant 0 : i32
    return %c0_i32, %arg1 : i32, i32
  }
  func.func @transform_3(%arg0: i32, %arg1: i32) -> (i32, i32) {
    %c0_i32 = arith.constant 0 : i32
    %c0_i32_0 = arith.constant 0 : i32
    return %arg1, %c0_i32 : i32, i32
  }
  func.func @transform_4(%arg0: i32, %arg1: i32) -> (i32, i32) {
    %c0_i32 = arith.constant 0 : i32
    %c0_i32_0 = arith.constant 0 : i32
    %c0_i32_1 = arith.constant 0 : i32
    return %c0_i32, %c0_i32_0 : i32, i32
  }
  func.func @transform_5(%arg0: i32, %arg1: i32) -> (i32, i32) {
    %c0_i32 = arith.constant 0 : i32
    %c0_i32_0 = arith.constant 0 : i32
    return %arg0, %c0_i32 : i32, i32
  }
}

</mosaic_0001>

<llo_original>
// kernel: tpu_custom_call.1
$region0: #{tpu_custom_call.1}
  #allocation0 [shape = 'u32[]', space=smem, size = 0x4, offset = 0x4, fixed_abs, tag = 'smem constant byte address 0x4 - core index']
  #allocation1 [shape = 'u32[144,128]{1,0:T(1,128)}', space=vmem, size = 0x12000, scoped, tag = 'internal scratch']
  #allocation2 [shape = 'f32[16,128]{1,0:T(8,128)}', space=vmem, size = 0x2000, scoped, tag = 'scratch operand']
  %s0 = inlined_call_operand.hbm [shape: f32[16,128], index: 0, kind: input, shape index: {}]
  %s1 = inlined_call_operand.hbm [shape: f32[128,128], index: 1, kind: input, shape index: {}]
  %s2 = inlined_call_operand.vmem [shape: f32[1,128], index: 2, kind: input, shape index: {}]
  %s3 = inlined_call_operand.hbm [shape: f32[128,128], index: 3, kind: input, shape index: {}]
  %s4 = inlined_call_operand.vmem [shape: f32[1,128], index: 4, kind: input, shape index: {}]
  %s5 = inlined_call_operand.hbm [shape: f32[16,128], index: 5, kind: output, shape index: {}]
  %s6 = sld [smem:[#allocation0]]
  $region50: #{tpu_custom_call.1} parent=0
    _
  %s8 = ssub.s32 1, %s6
  %s9 = scalar_select 0, %s8, %s6
  $region1: #{tpu_custom_call.1} parent=0
    #allocation3 [shape = 'u8[8192]{0}', space=vmem, size = 0x2000, scoped, tag = 'input window, operand 0, single buffered']
    #allocation4 [shape = 's32[1]{0}', space=sflag, size = 0x4, scoped, tag = 'scoped memory for tpu_custom_call.1']
    #allocation5 [shape = 's32[1]{0}', space=sflag, size = 0x4, scoped, tag = 'scoped memory for tpu_custom_call.1']
    #allocation6 [shape = 'u8[65536]{0}', space=vmem, size = 0x10000, scoped, tag = 'input window, operand 1, single buffered']
    #allocation7 [shape = 's32[1]{0}', space=sflag, size = 0x4, scoped, tag = 'scoped memory for tpu_custom_call.1']
    #allocation8 [shape = 'u8[65536]{0}', space=vmem, size = 0x10000, scoped, tag = 'input window, operand 3, single buffered']
    #allocation9 [shape = 'u8[8192]{0}', space=vmem, size = 0x2000, scoped, tag = 'output window, operand 0, single buffered']
    %10 = vsyncpa [#allocation4], 0
    %11 = vsyncpa [#allocation7], 0
    %12 = vsyncpa [#allocation5], 0
    // Predicated region
    $region2: #{tpu_custom_call.1} parent=1 // pred_check
      _
    $region3: #{tpu_custom_call.1} parent=1 // pred_check_branch
      %14 = sbr.rel (0) target = $region5
    $region4: #{tpu_custom_call.1} parent=1 // pred_region
      %s16 = ssub.s32 256, 256
      %17 = vsyncadd [#allocation4], %s16
      %s18 = sshll.u32 [#allocation3], 4
      %s19 = int_to_ptr.vmem [resolvable:$true] %s18
      %24 = dma.hbm_to_vmem [thread:$0]  %s0, 256, %s19, [#allocation4], 128, 128, 8
    $region5: #{tpu_custom_call.1} parent=1 // pred_fallthru
      _
    // Predicated region
    $region6: #{tpu_custom_call.1} parent=1 // pred_check
      _
    $region7: #{tpu_custom_call.1} parent=1 // pred_check_branch
      %26 = sbr.rel (0) target = $region9
    $region8: #{tpu_custom_call.1} parent=1 // pred_region
      %s28 = ssub.s32 2048, 2048
      %29 = vsyncadd [#allocation7], %s28
      %s30 = sshll.u32 [#allocation6], 4
      %s31 = int_to_ptr.vmem [resolvable:$true] %s30
      %36 = dma.hbm_to_vmem [thread:$0]  %s1, 2048, %s31, [#allocation7], 128, 128, 8
    $region9: #{tpu_custom_call.1} parent=1 // pred_fallthru
      _
    // Predicated region
    $region10: #{tpu_custom_call.1} parent=1 // pred_check
      _
    $region11: #{tpu_custom_call.1} parent=1 // pred_check_branch
      %38 = sbr.rel (0) target = $region13
    $region12: #{tpu_custom_call.1} parent=1 // pred_region
      _
    $region13: #{tpu_custom_call.1} parent=1 // pred_fallthru
      _
    // Predicated region
    $region14: #{tpu_custom_call.1} parent=1 // pred_check
      _
    $region15: #{tpu_custom_call.1} parent=1 // pred_check_branch
      %40 = sbr.rel (0) target = $region17
    $region16: #{tpu_custom_call.1} parent=1 // pred_region
      %s42 = ssub.s32 2048, 2048
      %43 = vsyncadd [#allocation7], %s42
      %s44 = sshll.u32 [#allocation8], 4
      %s45 = int_to_ptr.vmem [resolvable:$true] %s44
      %50 = dma.hbm_to_vmem [thread:$0]  %s3, 2048, %s45, [#allocation7], 128, 128, 8
    $region17: #{tpu_custom_call.1} parent=1 // pred_fallthru
      _
    // Predicated region
    $region18: #{tpu_custom_call.1} parent=1 // pred_check
      _
    $region19: #{tpu_custom_call.1} parent=1 // pred_check_branch
      %52 = sbr.rel (0) target = $region21
    $region20: #{tpu_custom_call.1} parent=1 // pred_region
      _
    $region21: #{tpu_custom_call.1} parent=1 // pred_fallthru
      _
    // Predicated region
    $region22: #{tpu_custom_call.1} parent=1 // pred_check
      _
    $region23: #{tpu_custom_call.1} parent=1 // pred_check_branch
      %54 = sbr.rel (0) target = $region25
    $region24: #{tpu_custom_call.1} parent=1 // pred_region
      %55 = dma.done [#allocation4], 256
    $region25: #{tpu_custom_call.1} parent=1 // pred_fallthru
      _
    // Predicated region
    $region26: #{tpu_custom_call.1} parent=1 // pred_check
      _
    $region27: #{tpu_custom_call.1} parent=1 // pred_check_branch
      %57 = sbr.rel (0) target = $region29
    $region28: #{tpu_custom_call.1} parent=1 // pred_region
      %58 = dma.done [#allocation7], 2048
    $region29: #{tpu_custom_call.1} parent=1 // pred_fallthru
      _
    // Predicated region
    $region30: #{tpu_custom_call.1} parent=1 // pred_check
      _
    $region31: #{tpu_custom_call.1} parent=1 // pred_check_branch
      %60 = sbr.rel (0) target = $region33
    $region32: #{tpu_custom_call.1} parent=1 // pred_region
      %61 = dma.done [#allocation7], 2048
    $region33: #{tpu_custom_call.1} parent=1 // pred_fallthru
      _
    %p62 = scmp.eq.s32.totalorder 0, 0
    // Predicated region
    $region34: #{tpu_custom_call.1} parent=1 // pred_check
      %p63 = pneg %p62
    $region35: #{tpu_custom_call.1} parent=1 // pred_check_branch
      %65 = sbr.rel (%p63) target = $region37
    $region36: #{tpu_custom_call.1} parent=1 // pred_region
      %v66 = vld [vmem:[%s4] sm:$0x1]
      %v68 = vlaneseq
      %v69 = vshrl.u32 %v68, 7
      %v70 = vsub.s32 0, %v69
      %v71 = vrot.slane %v66, %v70
      %73 = vst [vmem:[#allocation2] sm:$0xff] %v71
      %74 = vst [vmem:[#allocation2 + $0x8] sm:$0xff] %v71
    $region37: #{tpu_custom_call.1} parent=1 // pred_fallthru
      _
    %v75 = vld [vmem:[#allocation3] sm:$0xff]
    %v76 = vld [vmem:[#allocation3 + $0x8] sm:$0xff]
    %v77 = vld [vmem:[#allocation6] sm:$0xff]
    %v78 = vld [vmem:[#allocation6 + $0x8] sm:$0xff]
    %v79 = vld [vmem:[#allocation6 + $0x10] sm:$0xff]
    %v80 = vld [vmem:[#allocation6 + $0x18] sm:$0xff]
    %v81 = vld [vmem:[#allocation6 + $0x20] sm:$0xff]
    %v82 = vld [vmem:[#allocation6 + $0x28] sm:$0xff]
    %v83 = vld [vmem:[#allocation6 + $0x30] sm:$0xff]
    %v84 = vld [vmem:[#allocation6 + $0x38] sm:$0xff]
    %v85 = vld [vmem:[#allocation6 + $0x40] sm:$0xff]
    %v86 = vld [vmem:[#allocation6 + $0x48] sm:$0xff]
    %v87 = vld [vmem:[#allocation6 + $0x50] sm:$0xff]
    %v88 = vld [vmem:[#allocation6 + $0x58] sm:$0xff]
    %v89 = vld [vmem:[#allocation6 + $0x60] sm:$0xff]
    %v90 = vld [vmem:[#allocation6 + $0x68] sm:$0xff]
    %v91 = vld [vmem:[#allocation6 + $0x70] sm:$0xff]
    %v92 = vld [vmem:[#allocation6 + $0x78] sm:$0xff]
    %v93 = vld [vmem:[%s2] sm:$0x1]
    %v95 = vlaneseq
    %v96 = vshrl.u32 %v95, 7
    %v97 = vsub.s32 0, %v96
    %v98 = vrot.slane %v93, %v97
    %100 = vmatprep.subr.mxu0 0.0
    %101 = vmatpush1.msra.mxu0 %v92
    %102 = vmatprep.subr.mxu0 0.0
    %103 = vmatpush1.msra.mxu0 %v91
    %104 = vmatprep.subr.mxu0 0.0
    %105 = vmatpush1.msra.mxu0 %v90
    %106 = vmatprep.subr.mxu0 0.0
    %107 = vmatpush1.msra.mxu0 %v89
    %108 = vmatprep.subr.mxu0 0.0
    %109 = vmatpush1.msra.mxu0 %v88
    %110 = vmatprep.subr.mxu0 0.0
    %111 = vmatpush1.msra.mxu0 %v87
    %112 = vmatprep.subr.mxu0 0.0
    %113 = vmatpush1.msra.mxu0 %v86
    %114 = vmatprep.subr.mxu0 0.0
    %115 = vmatpush1.msra.mxu0 %v85
    %116 = vmatprep.subr.mxu0 0.0
    %117 = vmatpush1.msra.mxu0 %v84
    %118 = vmatprep.subr.mxu0 0.0
    %119 = vmatpush1.msra.mxu0 %v83
    %120 = vmatprep.subr.mxu0 0.0
    %121 = vmatpush1.msra.mxu0 %v82
    %122 = vmatprep.subr.mxu0 0.0
    %123 = vmatpush1.msra.mxu0 %v81
    %124 = vmatprep.subr.mxu0 0.0
    %125 = vmatpush1.msra.mxu0 %v80
    %126 = vmatprep.subr.mxu0 0.0
    %127 = vmatpush1.msra.mxu0 %v79
    %128 = vmatprep.subr.mxu0 0.0
    %129 = vmatpush1.msra.mxu0 %v78
    %130 = vmatprep.subr.mxu0 0.0
    %131 = vmatpush1.msra.mxu0 %v77
    %132 = vmatprep.subr.mxu0 0.0
    %133 = vmatpush2.msra.mxu0 0.0
    %134 = vmatprep.subr.mxu0 0.0
    %135 = vmatpush2.msra.mxu0 0.0
    %136 = vmatprep.subr.mxu0 0.0
    %137 = vmatpush2.msra.mxu0 0.0
    %138 = vmatprep.subr.mxu0 0.0
    %139 = vmatpush2.msra.mxu0 0.0
    %140 = vmatprep.subr.mxu0 0.0
    %141 = vmatpush2.msra.mxu0 0.0
    %142 = vmatprep.subr.mxu0 0.0
    %143 = vmatpush2.msra.mxu0 0.0
    %144 = vmatprep.subr.mxu0 0.0
    %145 = vmatpush2.msra.mxu0 0.0
    %146 = vmatprep.subr.mxu0 0.0
    %147 = vmatpush2.msra.mxu0 0.0
    %148 = vmatprep.subr.mxu0 0.0
    %149 = vmatpush2.msra.mxu0 0.0
    %150 = vmatprep.subr.mxu0 0.0
    %151 = vmatpush2.msra.mxu0 0.0
    %152 = vmatprep.subr.mxu0 0.0
    %153 = vmatpush2.msra.mxu0 0.0
    %154 = vmatprep.subr.mxu0 0.0
    %155 = vmatpush2.msra.mxu0 0.0
    %156 = vmatprep.subr.mxu0 0.0
    %157 = vmatpush2.msra.mxu0 0.0
    %158 = vmatprep.subr.mxu0 0.0
    %159 = vmatpush2.msra.mxu0 0.0
    %160 = vmatprep.subr.mxu0 0.0
    %161 = vmatpush2.msra.mxu0 0.0
    %162 = vmatprep.subr.mxu0 0.0
    %163 = vmatpush2.msra.mxu0 0.0
    %164 = vmatprep.mubr.f32.mxu0 0.0
    %165 = vmatmul.mubr.f32.gmra.mxu0 %v75
    %v166 = vpop.f32.mrf.mxu0
    %v167 = vadd.f32 %v98, %v166
    %v168 = vpop.f32.mrf.mxu0
    %169 = vmatprep.mubr.f32.mxu0 0.0
    %170 = vmatmul.mubr.f32.gmra.mxu0 %v76
    %v171 = vpop.f32.mrf.mxu0
    %v172 = vadd.f32 %v98, %v171
    %v173 = vpop.f32.mrf.mxu0
    %174 = vdwg.mxu0
    %v175 = vmul.f32 %v167, 0.5
    %v176 = vmul.f32 %v172, 0.5
    %v177 = vmul.f32 %v167, 0.70710677
    %v178 = vmul.f32 %v172, 0.70710677
    %v179 = verf.f32.pop %v177
    %v180 = verf.f32.pop %v178
    %v181 = vadd.f32 %v179, 1.0
    %v182 = vadd.f32 %v180, 1.0
    %v183 = vmul.f32 %v175, %v181
    %v184 = vmul.f32 %v176, %v182
    %v185 = vld [vmem:[#allocation2] sm:$0xff]
    %v186 = vld [vmem:[#allocation2 + $0x8] sm:$0xff]
    %v187 = vld [vmem:[#allocation8] sm:$0xff]
    %v188 = vld [vmem:[#allocation8 + $0x8] sm:$0xff]
    %v189 = vld [vmem:[#allocation8 + $0x10] sm:$0xff]
    %v190 = vld [vmem:[#allocation8 + $0x18] sm:$0xff]
    %v191 = vld [vmem:[#allocation8 + $0x20] sm:$0xff]
    %v192 = vld [vmem:[#allocation8 + $0x28] sm:$0xff]
    %v193 = vld [vmem:[#allocation8 + $0x30] sm:$0xff]
    %v194 = vld [vmem:[#allocation8 + $0x38] sm:$0xff]
    %v195 = vld [vmem:[#allocation8 + $0x40] sm:$0xff]
    %v196 = vld [vmem:[#allocation8 + $0x48] sm:$0xff]
    %v197 = vld [vmem:[#allocation8 + $0x50] sm:$0xff]
    %v198 = vld [vmem:[#allocation8 + $0x58] sm:$0xff]
    %v199 = vld [vmem:[#allocation8 + $0x60] sm:$0xff]
    %v200 = vld [vmem:[#allocation8 + $0x68] sm:$0xff]
    %v201 = vld [vmem:[#allocation8 + $0x70] sm:$0xff]
    %v202 = vld [vmem:[#allocation8 + $0x78] sm:$0xff]
    %203 = vmatprep.subr.mxu0 0.0
    %204 = vmatpush1.msra.mxu0 %v202
    %205 = vmatprep.subr.mxu0 0.0
    %206 = vmatpush1.msra.mxu0 %v201
    %207 = vmatprep.subr.mxu0 0.0
    %208 = vmatpush1.msra.mxu0 %v200
    %209 = vmatprep.subr.mxu0 0.0
    %210 = vmatpush1.msra.mxu0 %v199
    %211 = vmatprep.subr.mxu0 0.0
    %212 = vmatpush1.msra.mxu0 %v198
    %213 = vmatprep.subr.mxu0 0.0
    %214 = vmatpush1.msra.mxu0 %v197
    %215 = vmatprep.subr.mxu0 0.0
    %216 = vmatpush1.msra.mxu0 %v196
    %217 = vmatprep.subr.mxu0 0.0
    %218 = vmatpush1.msra.mxu0 %v195
    %219 = vmatprep.subr.mxu0 0.0
    %220 = vmatpush1.msra.mxu0 %v194
    %221 = vmatprep.subr.mxu0 0.0
    %222 = vmatpush1.msra.mxu0 %v193
    %223 = vmatprep.subr.mxu0 0.0
    %224 = vmatpush1.msra.mxu0 %v192
    %225 = vmatprep.subr.mxu0 0.0
    %226 = vmatpush1.msra.mxu0 %v191
    %227 = vmatprep.subr.mxu0 0.0
    %228 = vmatpush1.msra.mxu0 %v190
    %229 = vmatprep.subr.mxu0 0.0
    %230 = vmatpush1.msra.mxu0 %v189
    %231 = vmatprep.subr.mxu0 0.0
    %232 = vmatpush1.msra.mxu0 %v188
    %233 = vmatprep.subr.mxu0 0.0
    %234 = vmatpush1.msra.mxu0 %v187
    %235 = vmatprep.subr.mxu0 0.0
    %236 = vmatpush2.msra.mxu0 0.0
    %237 = vmatprep.subr.mxu0 0.0
    %238 = vmatpush2.msra.mxu0 0.0
    %239 = vmatprep.subr.mxu0 0.0
    %240 = vmatpush2.msra.mxu0 0.0
    %241 = vmatprep.subr.mxu0 0.0
    %242 = vmatpush2.msra.mxu0 0.0
    %243 = vmatprep.subr.mxu0 0.0
    %244 = vmatpush2.msra.mxu0 0.0
    %245 = vmatprep.subr.mxu0 0.0
    %246 = vmatpush2.msra.mxu0 0.0
    %247 = vmatprep.subr.mxu0 0.0
    %248 = vmatpush2.msra.mxu0 0.0
    %249 = vmatprep.subr.mxu0 0.0
    %250 = vmatpush2.msra.mxu0 0.0
    %251 = vmatprep.subr.mxu0 0.0
    %252 = vmatpush2.msra.mxu0 0.0
    %253 = vmatprep.subr.mxu0 0.0
    %254 = vmatpush2.msra.mxu0 0.0
    %255 = vmatprep.subr.mxu0 0.0
    %256 = vmatpush2.msra.mxu0 0.0
    %257 = vmatprep.subr.mxu0 0.0
    %258 = vmatpush2.msra.mxu0 0.0
    %259 = vmatprep.subr.mxu0 0.0
    %260 = vmatpush2.msra.mxu0 0.0
    %261 = vmatprep.subr.mxu0 0.0
    %262 = vmatpush2.msra.mxu0 0.0
    %263 = vmatprep.subr.mxu0 0.0
    %264 = vmatpush2.msra.mxu0 0.0
    %265 = vmatprep.subr.mxu0 0.0
    %266 = vmatpush2.msra.mxu0 0.0
    %267 = vmatprep.mubr.f32.mxu0 0.0
    %268 = vmatmul.mubr.f32.gmra.mxu0 %v183
    %v269 = vpop.f32.mrf.mxu0
    %v270 = vadd.f32 0.0, %v269
    %v271 = vpop.f32.mrf.mxu0
    %272 = vmatprep.mubr.f32.mxu0 0.0
    %273 = vmatmul.mubr.f32.gmra.mxu0 %v184
    %v274 = vpop.f32.mrf.mxu0
    %v275 = vadd.f32 0.0, %v274
    %v276 = vpop.f32.mrf.mxu0
    %277 = vdwg.mxu0
    %v278 = vadd.f32 %v185, %v270
    %v279 = vadd.f32 %v186, %v275
    %280 = vst [vmem:[#allocation2] sm:$0xff] %v278
    %281 = vst [vmem:[#allocation2 + $0x8] sm:$0xff] %v279
    // Predicated region
    $region38: #{tpu_custom_call.1} parent=1 // pred_check
      %p282 = pneg %p62
    $region39: #{tpu_custom_call.1} parent=1 // pred_check_branch
      %284 = sbr.rel (%p282) target = $region41
    $region40: #{tpu_custom_call.1} parent=1 // pred_region
      %v285 = vld [vmem:[#allocation2] sm:$0xff]
      %v286 = vld [vmem:[#allocation2 + $0x8] sm:$0xff]
      %287 = vst [vmem:[#allocation9] sm:$0xff] %v285
      %288 = vst [vmem:[#allocation9 + $0x8] sm:$0xff] %v286
    $region41: #{tpu_custom_call.1} parent=1 // pred_fallthru
      _
    // Predicated region
    $region42: #{tpu_custom_call.1} parent=1 // pred_check
      _
    $region43: #{tpu_custom_call.1} parent=1 // pred_check_branch
      %290 = sbr.rel (0) target = $region45
    $region44: #{tpu_custom_call.1} parent=1 // pred_region
      %s292 = ssub.s32 256, 256
      %293 = vsyncadd [#allocation5], %s292
      %s294 = sshll.u32 [#allocation9], 4
      %s295 = int_to_ptr.vmem [resolvable:$true] %s294
      %300 = dma.vmem_to_hbm [thread:$0]  %s295, 256, %s5, [#allocation5], 128, 128, 8
    $region45: #{tpu_custom_call.1} parent=1 // pred_fallthru
      _
    // Predicated region
    $region46: #{tpu_custom_call.1} parent=1 // pred_check
      _
    $region47: #{tpu_custom_call.1} parent=1 // pred_check_branch
      %302 = sbr.rel (0) target = $region49
    $region48: #{tpu_custom_call.1} parent=1 // pred_region
      %303 = dma.done [#allocation5], 256
    $region49: #{tpu_custom_call.1} parent=1 // pred_fallthru
      _
    %304 = vsyncpa [#allocation4], 1
    %305 = vsyncpa [#allocation7], 1
    %306 = vsyncpa [#allocation5], 1

</llo_original>
